<compile_context>
chip_gen: v5e
topology: v5e:2x2
jax: 0.10.0
libtpu: 0.0.40
codegen_flags: <defaults>
</compile_context>

<pallas_src>
import functools

import jax
import jax.numpy as jnp
from jax.experimental import pallas as pl
from jax.experimental.pallas import tpu as pltpu

_EPS = 1e-8


def _unit_phase(sum_re, sum_im, n_ch):
    """(cos, sin) of stable_angle(sum_re + i*sum_im), sums over n_ch channels."""
    # stable_angle clamp on the channel *sum*: |mean_im| < eps  <=>  |sum_im| < C*eps,
    # and atan2(C*eps, sum_re) == atan2(eps, mean_re) (positive scale cancels).
    eps_c = jnp.float32(n_ch * _EPS)
    sum_im = jnp.where(jnp.abs(sum_im) < eps_c, eps_c, sum_im)
    # exp(i*atan2(im, re)) == (re + i*im) * rsqrt(re^2 + im^2); |im| >= eps so the
    # rsqrt is always well defined.  (f32 overflow of the squares only matters
    # for |z_sum| > ~1.8e19 -- far outside this module's operating range.)
    inv_r = jax.lax.rsqrt(sum_re * sum_re + sum_im * sum_im)
    return sum_re * inv_r, sum_im * inv_r


def _collapse_kernel_folded(n_ch, m_ref, phi_ref, re_ref, im_ref):
    """Block (1, 8, T): channel c of spatial group g sits in sublane c*G + g
    (G = 8 // n_ch), so the channel reduction is a stride-G sublane sum done
    with log2(n_ch) roll-adds on full vregs and needs no broadcast back."""
    m = m_ref[0].astype(jnp.float32)          # (8, T)
    phi = phi_ref[0].astype(jnp.float32)
    # TODO(synk): if v7x profiling shows VALU-bound, a bounded-range sin/cos
    # polynomial (valid when phi is known to lie in [-pi, pi]) halves VPU work.
    re = m * jnp.cos(phi)
    im = m * jnp.sin(phi)

    sum_re, sum_im = re, im
    shift = 8 // n_ch                          # static Python loop: log2(n_ch) rolls
    while shift < 8:
        sum_re = sum_re + pltpu.roll(sum_re, shift, axis=0)
        sum_im = sum_im + pltpu.roll(sum_im, shift, axis=0)
        shift *= 2
    # Every sublane row now holds the full channel sum of its own spatial
    # group, already aligned with m -- multiply straight through.
    unit_re, unit_im = _unit_phase(sum_re, sum_im, n_ch)
    re_ref[0] = (m * unit_re).astype(re_ref.dtype)
    im_ref[0] = (m * unit_im).astype(im_ref.dtype)


def _collapse_kernel_generic(n_ch, m_ref, phi_ref, re_ref, im_ref):
    """Fallback for channel counts that do not fold into the 8 sublanes."""
    m = m_ref[0].astype(jnp.float32)          # (C, T)
    phi = phi_ref[0].astype(jnp.float32)
    re = m * jnp.cos(phi)
    im = m * jnp.sin(phi)
    sum_re = jnp.sum(re, axis=0, keepdims=True)   # (1, T)
    sum_im = jnp.sum(im, axis=0, keepdims=True)
    unit_re, unit_im = _unit_phase(sum_re, sum_im, n_ch)
    re_ref[0] = (m * unit_re).astype(re_ref.dtype)
    im_ref[0] = (m * unit_im).astype(im_ref.dtype)


def _pick_tile(s_lanes, per_lane_bytes, batch, budget_bytes, target_steps=8):
    """128-multiple spatial (lane) tile: fits the VMEM budget, targets the
    512-2048-lane HBM-roofline plateau, and yields enough grid steps to hide
    the pipeline prologue/epilogue and feed both v7x TensorCores."""
    if s_lanes < 128:
        return s_lanes                         # full-extent lane dim is legal
    budget_tile = max(128, (budget_bytes // per_lane_bytes) // 128 * 128)
    if s_lanes <= min(512, budget_tile):
        return s_lanes                         # one block per batch row
    tile = min(2048, budget_tile, max(128, (s_lanes // 128) * 128))
    # Shrink (not below 512) until there are enough total grid steps.
    while tile > 512 and batch * pl.cdiv(s_lanes, tile) < target_steps:
        tile -= 128
    # Prefer a tile that divides s_lanes (avoids a ragged, masked tail block).
    if s_lanes % 128 == 0:
        for t in range(tile, max(128, tile // 2) - 1, -128):
            if s_lanes % t == 0:
                return t
    return tile


def complex_phase_collapse(m, phi, *, planar=False, out_dtype=jnp.float32,
                           vmem_budget_bytes=8 * 1024 * 1024):
    """ComplexPhaseCollapse.forward.

    m, phi: float (B, C, H, W).  Returns complex64 (B, C, H, W) by default, or
    the planar (re, im) pair of `out_dtype` arrays if planar=True (skips the
    complex-assembly HBM pass).
    """
    B, C, H, W = phi.shape
    S = H * W
    in_dtype = jnp.promote_types(m.dtype, phi.dtype)
    if not jnp.issubdtype(in_dtype, jnp.floating):
        in_dtype = jnp.float32
    # Native-dtype inputs; the f32 upcast happens inside the kernel.  All
    # wrapper reshapes below are contiguous row-major views (no HBM pass).
    m2 = m.reshape(B, C, S).astype(in_dtype)
    phi2 = phi.reshape(B, C, S).astype(in_dtype)

    fold = (8 % C == 0) and (S % (8 // C) == 0)
    if fold:
        # Fold channels into the 8-sublane axis: (B, C, S) -> (B, 8, S*C/8).
        rows, s_lanes = 8, (S * C) // 8
        m2 = m2.reshape(B, rows, s_lanes)
        phi2 = phi2.reshape(B, rows, s_lanes)
        kernel = functools.partial(_collapse_kernel_folded, C)
    else:
        rows, s_lanes = C, S
        kernel = functools.partial(_collapse_kernel_generic, C)

    in_bytes = jnp.dtype(in_dtype).itemsize
    out_bytes = jnp.dtype(out_dtype).itemsize
    sub_rows = ((rows + 7) // 8) * 8           # sublane padding of the block
    # Per tile-lane VMEM: 2 inputs + 2 outputs double-buffered, plus ~6 live
    # f32 temporaries (re/im/sums/units) at the block's sublane height.
    per_lane = sub_rows * (2 * 2 * in_bytes + 2 * 2 * out_bytes + 6 * 4)
    tile = _pick_tile(s_lanes, per_lane, B, vmem_budget_bytes)
    footprint = per_lane * tile
    vmem_limit = int(min(32 * 2 ** 20, max(16 * 2 ** 20, 2 * footprint)))

    grid = (B, pl.cdiv(s_lanes, tile))
    spec = pl.BlockSpec((1, rows, tile), lambda b, s: (b, 0, s))

    out_re, out_im = pl.pallas_call(
        kernel,
        out_shape=(jax.ShapeDtypeStruct((B, rows, s_lanes), out_dtype),
                   jax.ShapeDtypeStruct((B, rows, s_lanes), out_dtype)),
        grid=grid,
        in_specs=[spec, spec],
        out_specs=(spec, spec),
        compiler_params=pltpu.CompilerParams(
            dimension_semantics=("parallel", "parallel"),
            vmem_limit_bytes=vmem_limit),
    )(m2, phi2)

    out_re = out_re.reshape(B, C, H, W)
    out_im = out_im.reshape(B, C, H, W)
    if planar:
        return out_re, out_im
    # TODO(synk): Pallas TPU has no complex dtype; assembling complex64 costs
    # one extra XLA pass -- pass planar=True when the consumer takes (re, im).
    return jax.lax.complex(out_re.astype(jnp.float32), out_im.astype(jnp.float32))


def _reference(m, phi):
    """Pure-JAX mirror of the PyTorch forward."""
    re_z = m * jnp.cos(phi)
    im_z = m * jnp.sin(phi)
    re_mean = re_z.mean(axis=1)                                    # (B, H, W)
    im_mean = im_z.mean(axis=1)
    im_s = jnp.where((im_mean < _EPS) & (im_mean > -_EPS), jnp.float32(_EPS), im_mean)
    ang = jnp.arctan2(im_s, re_mean)[:, None, :, :]                # (B, 1, H, W)
    return jax.lax.complex(m * jnp.cos(ang), m * jnp.sin(ang))     # broadcast over C


if __name__ == "__main__":
    key = jax.random.PRNGKey(0)

    def run_case(case_idx, B, C, H, W):
        k1, k2 = jax.random.split(jax.random.fold_in(key, case_idx))
        m = jax.random.normal(k1, (B, C, H, W), dtype=jnp.float32)
        phi = jax.random.normal(k2, (B, C, H, W), dtype=jnp.float32)
        y = jax.block_until_ready(complex_phase_collapse(m, phi))
        ref = _reference(m, phi)
        assert y.shape == (B, C, H, W) and y.dtype == jnp.complex64
        assert jnp.allclose(y, ref, rtol=1e-4, atol=1e-5), f"case {case_idx} mismatch"

    run_case(0, 2, 4, 16, 16)   # folded path: C=4 packed into the 8 sublanes
    run_case(1, 2, 3, 16, 16)   # generic fallback path: C does not divide 8
    print("KERNEL_OK")
</pallas_src>

<mosaic_0001>
module attributes {stable_mosaic.version = 11 : i64} {
  func.func @_collapse_kernel_folded(%arg0: i32, %arg1: i32, %arg2: memref<1x8x128xf32, #tpu.memory_space<vmem>>, %arg3: memref<1x8x128xf32, #tpu.memory_space<vmem>>, %arg4: memref<1x8x128xf32, #tpu.memory_space<vmem>>, %arg5: memref<1x8x128xf32, #tpu.memory_space<vmem>>) attributes {dimension_semantics = [#tpu.dimension_semantics<parallel>, #tpu.dimension_semantics<parallel>], iteration_bounds = array<i64: 2, 1>, scalar_prefetch = 0 : i64, scratch_operands = 0 : i64, tpu.core_type = #tpu.core_type<tc>, window_params = [{transform_indices = @transform_0, window_bounds = array<i64: 1, 8, 128>}, {transform_indices = @transform_1, window_bounds = array<i64: 1, 8, 128>}, {transform_indices = @transform_2, window_bounds = array<i64: 1, 8, 128>}, {transform_indices = @transform_3, window_bounds = array<i64: 1, 8, 128>}]} {
    %c0 = arith.constant 0 : index
    %c0_0 = arith.constant 0 : index
    %c0_1 = arith.constant 0 : index
    %0 = vector.load %arg2[%c0, %c0_0, %c0_1] : memref<1x8x128xf32, #tpu.memory_space<vmem>>, vector<1x8x128xf32>
    %1 = vector.shape_cast %0 : vector<1x8x128xf32> to vector<8x128xf32>
    %c0_2 = arith.constant 0 : index
    %c0_3 = arith.constant 0 : index
    %c0_4 = arith.constant 0 : index
    %2 = vector.load %arg3[%c0_2, %c0_3, %c0_4] : memref<1x8x128xf32, #tpu.memory_space<vmem>>, vector<1x8x128xf32>
    %3 = vector.shape_cast %2 : vector<1x8x128xf32> to vector<8x128xf32>
    %4 = math.cos %3 : vector<8x128xf32>
    %5 = arith.mulf %1, %4 : vector<8x128xf32>
    %6 = math.sin %3 : vector<8x128xf32>
    %7 = arith.mulf %1, %6 : vector<8x128xf32>
    %c2_i32 = arith.constant 2 : i32
    %8 = tpu.dynamic_rotate %5 by %c2_i32 dim 0 : vector<8x128xf32>, i32 -> vector<8x128xf32>
    %9 = arith.addf %5, %8 : vector<8x128xf32>
    %c2_i32_5 = arith.constant 2 : i32
    %10 = tpu.dynamic_rotate %7 by %c2_i32_5 dim 0 : vector<8x128xf32>, i32 -> vector<8x128xf32>
    %11 = arith.addf %7, %10 : vector<8x128xf32>
    %c4_i32 = arith.constant 4 : i32
    %12 = tpu.dynamic_rotate %9 by %c4_i32 dim 0 : vector<8x128xf32>, i32 -> vector<8x128xf32>
    %13 = arith.addf %9, %12 : vector<8x128xf32>
    %c4_i32_6 = arith.constant 4 : i32
    %14 = tpu.dynamic_rotate %11 by %c4_i32_6 dim 0 : vector<8x128xf32>, i32 -> vector<8x128xf32>
    %15 = arith.addf %11, %14 : vector<8x128xf32>
    %16 = math.absf %15 : vector<8x128xf32>
    %cst = arith.constant 4.000000e-08 : f32
    %17 = vector.broadcast %cst : f32 to vector<8x128xf32>
    %18 = arith.cmpf olt, %16, %17 : vector<8x128xf32>
    %cst_7 = arith.constant 4.000000e-08 : f32
    %19 = vector.broadcast %cst_7 : f32 to vector<8x128xf32>
    %20 = arith.select %18, %19, %15 : vector<8x128xi1>, vector<8x128xf32>
    %21 = arith.mulf %13, %13 : vector<8x128xf32>
    %22 = arith.mulf %20, %20 : vector<8x128xf32>
    %23 = arith.addf %21, %22 : vector<8x128xf32>
    %24 = math.rsqrt %23 : vector<8x128xf32>
    %25 = arith.mulf %13, %24 : vector<8x128xf32>
    %26 = arith.mulf %20, %24 : vector<8x128xf32>
    %27 = arith.mulf %1, %25 : vector<8x128xf32>
    %c0_8 = arith.constant 0 : index
    %c0_9 = arith.constant 0 : index
    %c0_10 = arith.constant 0 : index
    %28 = vector.load %arg4[%c0_8, %c0_9, %c0_10] : memref<1x8x128xf32, #tpu.memory_space<vmem>>, vector<1x8x128xf32>
    %29 = vector.shape_cast %28 : vector<1x8x128xf32> to vector<8x128xf32>
    %30 = vector.shape_cast %27 : vector<8x128xf32> to vector<1x8x128xf32>
    tpu.vector_store %arg4[%c0_8, %c0_9, %c0_10], %30 {strides = array<i32>} : memref<1x8x128xf32, #tpu.memory_space<vmem>>, vector<1x8x128xf32>,
    %31 = arith.mulf %1, %26 : vector<8x128xf32>
    %c0_11 = arith.constant 0 : index
    %c0_12 = arith.constant 0 : index
    %c0_13 = arith.constant 0 : index
    %32 = vector.load %arg5[%c0_11, %c0_12, %c0_13] : memref<1x8x128xf32, #tpu.memory_space<vmem>>, vector<1x8x128xf32>
    %33 = vector.shape_cast %32 : vector<1x8x128xf32> to vector<8x128xf32>
    %34 = vector.shape_cast %31 : vector<8x128xf32> to vector<1x8x128xf32>
    tpu.vector_store %arg5[%c0_11, %c0_12, %c0_13], %34 {strides = array<i32>} : memref<1x8x128xf32, #tpu.memory_space<vmem>>, vector<1x8x128xf32>,
    return
  }
  func.func @transform_0(%arg0: i32, %arg1: i32) -> (i32, i32, i32) {
    %c0_i32 = arith.constant 0 : i32
    %c0_i32_0 = arith.constant 0 : i32
    return %arg0, %c0_i32, %arg1 : i32, i32, i32
  }
  func.func @transform_1(%arg0: i32, %arg1: i32) -> (i32, i32, i32) {
    %c0_i32 = arith.constant 0 : i32
    %c0_i32_0 = arith.constant 0 : i32
    return %arg0, %c0_i32, %arg1 : i32, i32, i32
  }
  func.func @transform_2(%arg0: i32, %arg1: i32) -> (i32, i32, i32) {
    %c0_i32 = arith.constant 0 : i32
    %c0_i32_0 = arith.constant 0 : i32
    return %arg0, %c0_i32, %arg1 : i32, i32, i32
  }
  func.func @transform_3(%arg0: i32, %arg1: i32) -> (i32, i32, i32) {
    %c0_i32 = arith.constant 0 : i32
    %c0_i32_0 = arith.constant 0 : i32
    return %arg0, %c0_i32, %arg1 : i32, i32, i32
  }
}

</mosaic_0001>

<llo_original>
// kernel: tpu_custom_call.1
$region0: #{tpu_custom_call.1}
  #allocation0 [shape = 'u32[]', space=smem, size = 0x4, offset = 0x4, fixed_abs, tag = 'smem constant byte address 0x4 - core index']
  #allocation1 [shape = 'u32[72,128]{1,0:T(1,128)}', space=vmem, size = 0x9000, scoped, tag = 'internal scratch']
  %s0 = inlined_call_operand.hbm [shape: f32[2,8,128], index: 0, kind: input, shape index: {}]
  %s1 = inlined_call_operand.hbm [shape: f32[2,8,128], index: 1, kind: input, shape index: {}]
  %s2 = inlined_call_operand.hbm [shape: f32[2,8,128], index: 2, kind: output, shape index: {0}]
  %s3 = inlined_call_operand.hbm [shape: f32[2,8,128], index: 3, kind: output, shape index: {1}]
  %4 = xla_tuple %s2, %s3
  %s5 = sld [smem:[#allocation0]]
  $region57: #{tpu_custom_call.1} parent=0
    _
  %s7 = ssub.s32 1, %s5
  %s8 = scalar_select 0, %s7, %s5
  $region1: #{tpu_custom_call.1} parent=0
    #allocation2 [shape = 'u8[8192]{0}', space=vmem, size = 0x2000, scoped, tag = 'input window, operand 0']
    #allocation3 [shape = 's32[2]{0}', space=sflag, size = 0x8, scoped, tag = 'scoped memory for tpu_custom_call.1']
    #allocation4 [shape = 's32[2]{0}', space=sflag, size = 0x8, scoped, tag = 'scoped memory for tpu_custom_call.1']
    #allocation5 [shape = 'u8[8192]{0}', space=vmem, size = 0x2000, scoped, tag = 'input window, operand 1']
    #allocation6 [shape = 's32[2]{0}', space=sflag, size = 0x8, scoped, tag = 'scoped memory for tpu_custom_call.1']
    #allocation7 [shape = 'u8[8192]{0}', space=vmem, size = 0x2000, scoped, tag = 'output window, operand 0']
    #allocation8 [shape = 'u8[8192]{0}', space=vmem, size = 0x2000, scoped, tag = 'output window, operand 1']
    #allocation9 [shape = 's32[2]{0}', space=sflag, size = 0x8, scoped, tag = 'scoped memory for tpu_custom_call.1']
    %9 = vsyncpa [#allocation3], 0
    %s10 = scalar_lea.sflag [#allocation3], 1
    %11 = vsyncpa %s10, 0
    %12 = vsyncpa [#allocation6], 0
    %s13 = scalar_lea.sflag [#allocation6], 1
    %14 = vsyncpa %s13, 0
    %15 = vsyncpa [#allocation4], 0
    %s16 = scalar_lea.sflag [#allocation4], 1
    %17 = vsyncpa %s16, 0
    %18 = vsyncpa [#allocation9], 0
    %s19 = scalar_lea.sflag [#allocation9], 1
    %20 = vsyncpa %s19, 0
    loop: start=0, step=1, limit=4
    $region2: #{tpu_custom_call.1} parent=1 // loop_pre_header
      _
    $region3: #{tpu_custom_call.1} parent=1 // loop_header
      %s22 = sphi 0, %s26
      %p23 = scmp.ge.s32.totalorder %s22, 4
      %s29 = sphi 0, %s41
      %s30 = sphi 0, %s37
      %s31 = sphi 0, %s29
      %s32 = sphi 0, %s30
      %s33 = sphi 0, %s31
      %s34 = sphi 0, %s32
      %s46 = sphi 0, %s48
      %s49 = sphi 0, %s46
      %s50 = sphi 0, %s49
      %s66 = sphi 0, %s50
      %s74 = sphi 0, %s76
      %s77 = sphi 0, %s74
      %s78 = sphi 0, %s77
      %s94 = sphi 0, %s78
      %s102 = sphi 0, %s104
      %s105 = sphi 0, %s102
      %s106 = sphi 0, %s105
      %s122 = sphi 0, %s106
      %s130 = sphi 0, %s132
      %s133 = sphi 0, %s130
      %s134 = sphi 0, %s133
      %s150 = sphi 0, %s134
    $region4: #{tpu_custom_call.1} parent=1 // loop_header_branch
      %25 = sbr.rel (%p23) target = $region8
    $region5: #{tpu_custom_call.1} parent=1 // loop_body
      %s27 = ssub.s32 %s22, 1
      %s28 = ssub.s32 %s22, 2
      %s35 = sadd.s32 1, %s30
      %p36 = scmp.ge.s32.totalorder %s35, 1
      %s37 = scalar_select %p36, 0, %s35
      %s38 = sadd.s32 1, %s29
      %s39 = scalar_select %p36, %s38, %s29
      %p40 = scmp.ge.s32.totalorder %s39, 2
      %s41 = scalar_select %p40, 0, %s39
      %s42 = ssub.s32 %s29, %s41
      %s43 = ssub.s32 %s30, %s37
      %s44 = sor.u32 %s42, %s43
      %p45 = scmp.eq.s32.totalorder %s44, 0
      %s47 = sadd.s32 %s46, 1
      %s48 = scalar_select %p45, %s46, %s47
      %p51 = pneg %p45
      %p52 = scmp.eq.s32.totalorder %s22, 1
      %p53 = por %p51, %p52
      %p54 = scmp.ne.s32.totalorder %s46, %s49
      %p55 = scmp.eq.s32.totalorder %s22, 0
      %p56 = por %p54, %p55
      %p57 = scmp.ne.s32.totalorder %s46, %s49
      %p58 = scmp.eq.s32.totalorder %s27, 1
      %p59 = por %p57, %p58
      %p60 = scmp.ne.s32.totalorder %s49, %s50
      %p61 = scmp.eq.s32.totalorder %s27, 0
      %p62 = por %p60, %p61
      %p63 = scmp.ne.s32.totalorder %s49, %s50
      %p64 = scmp.eq.s32.totalorder %s28, 1
      %p65 = por %p63, %p64
      %p67 = scmp.ne.s32.totalorder %s50, %s66
      %p68 = scmp.eq.s32.totalorder %s28, 0
      %p69 = por %p67, %p68
      %s70 = ssub.s32 %s29, %s41
      %s71 = ssub.s32 %s30, %s37
      %s72 = sor.u32 %s70, %s71
      %p73 = scmp.eq.s32.totalorder %s72, 0
      %s75 = sadd.s32 %s74, 1
      %s76 = scalar_select %p73, %s74, %s75
      %p79 = pneg %p73
      %p80 = scmp.eq.s32.totalorder %s22, 1
      %p81 = por %p79, %p80
      %p82 = scmp.ne.s32.totalorder %s74, %s77
      %p83 = scmp.eq.s32.totalorder %s22, 0
      %p84 = por %p82, %p83
      %p85 = scmp.ne.s32.totalorder %s74, %s77
      %p86 = scmp.eq.s32.totalorder %s27, 1
      %p87 = por %p85, %p86
      %p88 = scmp.ne.s32.totalorder %s77, %s78
      %p89 = scmp.eq.s32.totalorder %s27, 0
      %p90 = por %p88, %p89
      %p91 = scmp.ne.s32.totalorder %s77, %s78
      %p92 = scmp.eq.s32.totalorder %s28, 1
      %p93 = por %p91, %p92
      %p95 = scmp.ne.s32.totalorder %s78, %s94
      %p96 = scmp.eq.s32.totalorder %s28, 0
      %p97 = por %p95, %p96
      %s98 = ssub.s32 %s29, %s41
      %s99 = ssub.s32 %s30, %s37
      %s100 = sor.u32 %s98, %s99
      %p101 = scmp.eq.s32.totalorder %s100, 0
      %s103 = sadd.s32 %s102, 1
      %s104 = scalar_select %p101, %s102, %s103
      %p107 = pneg %p101
      %p108 = scmp.eq.s32.totalorder %s22, 1
      %p109 = por %p107, %p108
      %p110 = scmp.ne.s32.totalorder %s102, %s105
      %p111 = scmp.eq.s32.totalorder %s22, 0
      %p112 = por %p110, %p111
      %p113 = scmp.ne.s32.totalorder %s102, %s105
      %p114 = scmp.eq.s32.totalorder %s27, 1
      %p115 = por %p113, %p114
      %p116 = scmp.ne.s32.totalorder %s105, %s106
      %p117 = scmp.eq.s32.totalorder %s27, 0
      %p118 = por %p116, %p117
      %p119 = scmp.ne.s32.totalorder %s105, %s106
      %p120 = scmp.eq.s32.totalorder %s28, 1
      %p121 = por %p119, %p120
      %p123 = scmp.ne.s32.totalorder %s106, %s122
      %p124 = scmp.eq.s32.totalorder %s28, 0
      %p125 = por %p123, %p124
      %s126 = ssub.s32 %s29, %s41
      %s127 = ssub.s32 %s30, %s37
      %s128 = sor.u32 %s126, %s127
      %p129 = scmp.eq.s32.totalorder %s128, 0
      %s131 = sadd.s32 %s130, 1
      %s132 = scalar_select %p129, %s130, %s131
      %p135 = pneg %p129
      %p136 = scmp.eq.s32.totalorder %s22, 1
      %p137 = por %p135, %p136
      %p138 = scmp.ne.s32.totalorder %s130, %s133
      %p139 = scmp.eq.s32.totalorder %s22, 0
      %p140 = por %p138, %p139
      %p141 = scmp.ne.s32.totalorder %s130, %s133
      %p142 = scmp.eq.s32.totalorder %s27, 1
      %p143 = por %p141, %p142
      %p144 = scmp.ne.s32.totalorder %s133, %s134
      %p145 = scmp.eq.s32.totalorder %s27, 0
      %p146 = por %p144, %p145
      %p147 = scmp.ne.s32.totalorder %s133, %s134
      %p148 = scmp.eq.s32.totalorder %s28, 1
      %p149 = por %p147, %p148
      %p151 = scmp.ne.s32.totalorder %s134, %s150
      %p152 = scmp.eq.s32.totalorder %s28, 0
      %p153 = por %p151, %p152
      %p154 = scmp.le.s32.totalorder 1, %s22
      %p155 = scmp.lt.s32.totalorder %s22, 3
      %p156 = pnand %p154, %p155
      %p157 = pneg %p156
      // Predicated region
      $region9: #{tpu_custom_call.1} parent=5 // pred_check
        _
      $region10: #{tpu_custom_call.1} parent=5 // pred_check_branch
        %159 = sbr.rel (%p156) target = $region12
      $region11: #{tpu_custom_call.1} parent=5 // pred_region
        %s160 = ssub.s32 %s22, 1
      $region12: #{tpu_custom_call.1} parent=5 // pred_fallthru
        _
      %p161 = scmp.lt.s32.totalorder %s22, 2
      // Predicated region
      $region13: #{tpu_custom_call.1} parent=5 // pred_check
        %p162 = pneg %p161
      $region14: #{tpu_custom_call.1} parent=5 // pred_check_branch
        %164 = sbr.rel (%p162) target = $region16
      $region15: #{tpu_custom_call.1} parent=5 // pred_region
        // Predicated region
        $region17: #{tpu_custom_call.1} parent=15 // pred_check
          %p165 = pneg %p56
        $region18: #{tpu_custom_call.1} parent=15 // pred_check_branch
          %167 = sbr.rel (%p165) target = $region20
        $region19: #{tpu_custom_call.1} parent=15 // pred_region
          %s168 = sand.u32 %s46, 1
          %s169 = scalar_lea.sflag [#allocation3], %s168
          %s170 = sand.u32 %s46, 1
          %s171 = smul.addr %s170, 8
          %s172 = scalar_lea.vmem [#allocation2], %s171
          %174 = vsyncadd %s169, 0
          %s175 = sadd.s32 %s30, %s29
          %s176 = smul.addr %s175, 8
          %s177 = scalar_lea.hbm %s0, %s176
          %s179 = sshll.u32 %s177, 4
          %s180 = int_to_ptr.hbm [resolvable:$true] %s179
          %s181 = sshll.u32 %s172, 4
          %s182 = int_to_ptr.vmem [resolvable:$true] %s181
          %184 = dma.hbm_to_vmem [thread:$0]  %s180, 128, %s182, %s169
        $region20: #{tpu_custom_call.1} parent=15 // pred_fallthru
          _
        // Predicated region
        $region21: #{tpu_custom_call.1} parent=15 // pred_check
          %p185 = pneg %p84
        $region22: #{tpu_custom_call.1} parent=15 // pred_check_branch
          %187 = sbr.rel (%p185) target = $region24
        $region23: #{tpu_custom_call.1} parent=15 // pred_region
          %s188 = sand.u32 %s74, 1
          %s189 = scalar_lea.sflag [#allocation6], %s188
          %s190 = sand.u32 %s74, 1
          %s191 = smul.addr %s190, 8
          %s192 = scalar_lea.vmem [#allocation5], %s191
          %194 = vsyncadd %s189, 0
          %s195 = sadd.s32 %s30, %s29
          %s196 = smul.addr %s195, 8
          %s197 = scalar_lea.hbm %s1, %s196
          %s199 = sshll.u32 %s197, 4
          %s200 = int_to_ptr.hbm [resolvable:$true] %s199
          %s201 = sshll.u32 %s192, 4
          %s202 = int_to_ptr.vmem [resolvable:$true] %s201
          %204 = dma.hbm_to_vmem [thread:$0]  %s200, 128, %s202, %s189
        $region24: #{tpu_custom_call.1} parent=15 // pred_fallthru
          _
      $region16: #{tpu_custom_call.1} parent=5 // pred_fallthru
        _
      %p205 = scmp.le.s32.totalorder 1, %s22
      %p206 = scmp.lt.s32.totalorder %s22, 3
      %p207 = pnand %p205, %p206
      %p208 = pneg %p207
      // Predicated region
      $region25: #{tpu_custom_call.1} parent=5 // pred_check
        _
      $region26: #{tpu_custom_call.1} parent=5 // pred_check_branch
        %210 = sbr.rel (%p207) target = $region28
      $region27: #{tpu_custom_call.1} parent=5 // pred_region
        %s211 = ssub.s32 %s22, 1
        %s212 = sand.u32 %s49, 1
        %s213 = scalar_lea.sflag [#allocation3], %s212
        %s214 = sand.u32 %s49, 1
        %s215 = smul.addr %s214, 8
        %s216 = scalar_lea.vmem [#allocation2], %s215
        // Predicated region
        $region29: #{tpu_custom_call.1} parent=27 // pred_check
          %p217 = pneg %p62
        $region30: #{tpu_custom_call.1} parent=27 // pred_check_branch
          %219 = sbr.rel (%p217) target = $region32
        $region31: #{tpu_custom_call.1} parent=27 // pred_region
          %221 = dma.done %s213, 128
        $region32: #{tpu_custom_call.1} parent=27 // pred_fallthru
          _
        %s222 = sand.u32 %s77, 1
        %s223 = scalar_lea.sflag [#allocation6], %s222
        %s224 = sand.u32 %s77, 1
        %s225 = smul.addr %s224, 8
        %s226 = scalar_lea.vmem [#allocation5], %s225
        // Predicated region
        $region33: #{tpu_custom_call.1} parent=27 // pred_check
          %p227 = pneg %p90
        $region34: #{tpu_custom_call.1} parent=27 // pred_check_branch
          %229 = sbr.rel (%p227) target = $region36
        $region35: #{tpu_custom_call.1} parent=27 // pred_region
          %231 = dma.done %s223, 128
        $region36: #{tpu_custom_call.1} parent=27 // pred_fallthru
          _
        %s232 = sand.u32 %s49, 1
        %s233 = scalar_lea.sflag [#allocation3], %s232
        %s234 = sand.u32 %s49, 1
        %s235 = smul.addr %s234, 8
        %s236 = scalar_lea.vmem [#allocation2], %s235
        %p237 = pneg %p62
        %p238 = pneg %p59
        %s239 = sand.u32 %s77, 1
        %s240 = scalar_lea.sflag [#allocation6], %s239
        %s241 = sand.u32 %s77, 1
        %s242 = smul.addr %s241, 8
        %s243 = scalar_lea.vmem [#allocation5], %s242
        %p244 = pneg %p90
        %p245 = pneg %p87
        %p246 = pneg %p118
        %p247 = pneg %p115
        %s248 = sand.u32 %s105, 1
        %s249 = scalar_lea.sflag [#allocation4], %s248
        %s250 = sand.u32 %s105, 1
        %s251 = smul.addr %s250, 8
        %s252 = scalar_lea.vmem [#allocation7], %s251
        %p253 = pneg %p146
        %p254 = pneg %p143
        %s255 = sand.u32 %s133, 1
        %s256 = scalar_lea.sflag [#allocation9], %s255
        %s257 = sand.u32 %s133, 1
        %s258 = smul.addr %s257, 8
        %s259 = scalar_lea.vmem [#allocation8], %s258
        %v260 = vld [vmem:[%s216] sm:$0xff]
        %v261 = vld [vmem:[%s226] sm:$0xff]
        %v262 = vand.u32 2147483647, %v261
        %vm263 = vcmp.le.f32.partialorder %v262, 0.7853982
        %vm264 = vcmp.lt.s32.totalorder %v261, 0
        %v265 = vand.u32 %v261, 2139095040
        %v266 = vshrl.u32 %v265, 23
        %v267 = vsub.s32 %v266, 127
        %v268 = vand.u32 2147483647, %v261
        %v269 = vand.u32 %v268, 8388607
        %v270 = vor.u32 %v269, 8388608
        %v271 = vsub.s32 0, %v270
        %v272 = vadd.s32 %v267, 1
        %vm273 = vcmp.gt.s32.totalorder %v272, 0
        %v274 = vsel %vm273, %v272, 0
        %v275 = vshrl.u32 %v274, 5
        %v276 = vand.u32 %v274, 31
        %v277 = vsub.s32 32, %v276
        %v278 = vshrl.u32 683565275, %v277
        %v279 = vshll.u32 683565275, %v276
        %v280 = vshrl.u32 2475754826, %v277
        %v281 = vor.u32 %v279, %v280
        %v282 = vshll.u32 2475754826, %v276
        %v283 = vshrl.u32 2131351028, %v277
        %v284 = vor.u32 %v282, %v283
        %v285 = vshll.u32 2131351028, %v276
        %v286 = vshrl.u32 2102212464, %v277
        %v287 = vor.u32 %v285, %v286
        %v288 = vshll.u32 2102212464, %v276
        %v289 = vshrl.u32 920167782, %v277
        %v290 = vor.u32 %v288, %v289
        %v291 = vshll.u32 920167782, %v276
        %v292 = vshrl.u32 1326507024, %v277
        %v293 = vor.u32 %v291, %v292
        %vm294 = vcmp.lt.s32.totalorder %v275, 1
        %vm295 = vcmp.lt.s32.totalorder %v275, 2
        %vm296 = vcmp.lt.s32.totalorder %v275, 3
        %vm297 = vcmp.lt.s32.totalorder %v275, 4
        %v298 = vsel %vm294, %v278, %v281
        %v299 = vsel %vm297, %v287, 2102212464
        %v300 = vsel %vm296, %v284, %v299
        %v301 = vsel %vm295, %v298, %v300
        %v302 = vsel %vm294, %v281, %v284
        %v303 = vsel %vm297, %v290, 920167782
        %v304 = vsel %vm296, %v287, %v303
        %v305 = vsel %vm295, %v302, %v304
        %v306 = vsel %vm294, %v284, %v287
        %v307 = vsel %vm297, %v293, 1326507024
        %v308 = vsel %vm296, %v290, %v307
        %v309 = vsel %vm295, %v306, %v308
        %v310 = vshll.u32 %v270, 8
        %v311 = vand.u32 %v310, 65535
        %v312 = vshrl.u32 %v310, 16
        %v313 = vand.u32 %v309, 65535
        %v314 = vshrl.u32 %v309, 16
        %v315 = vmul.u32 %v311, %v313
        %v316 = vmul.u32 %v311, %v314
        %v317 = vmul.u32 %v312, %v313
        %v318 = vmul.u32 %v312, %v314
        %v319 = vshll.u32 %v316, 16
        %v320 = vshrl.u32 %v316, 16
        %v321 = vshll.u32 %v317, 16
        %v322 = vshrl.u32 %v317, 16
        %vm323 = vc.u32 %v315, %v319
        %v324 = vsel %vm323, 1, 0
        %v325 = vadd.s32 %v315, %v319
        %v326 = vadd.s32 %v318, %v324
        %vm327 = vc.u32 %v325, %v321
        %v328 = vsel %vm327, 1, 0
        %v329 = vadd.s32 %v325, %v321
        %v330 = vadd.s32 %v326, %v328
        %v331 = vadd.s32 %v330, %v320
        %v332 = vadd.s32 %v331, %v322
        %v333 = vand.u32 %v310, 65535
        %v334 = vshrl.u32 %v310, 16
        %v335 = vand.u32 %v305, 65535
        %v336 = vshrl.u32 %v305, 16
        %v337 = vmul.u32 %v333, %v335
        %v338 = vmul.u32 %v333, %v336
        %v339 = vmul.u32 %v334, %v335
        %v340 = vmul.u32 %v334, %v336
        %v341 = vshll.u32 %v338, 16
        %v342 = vshrl.u32 %v338, 16
        %v343 = vshll.u32 %v339, 16
        %v344 = vshrl.u32 %v339, 16
        %vm345 = vc.u32 %v337, %v341
        %v346 = vsel %vm345, 1, 0
        %v347 = vadd.s32 %v337, %v341
        %v348 = vadd.s32 %v340, %v346
        %vm349 = vc.u32 %v347, %v343
        %v350 = vsel %vm349, 1, 0
        %v351 = vadd.s32 %v347, %v343
        %v352 = vadd.s32 %v348, %v350
        %v353 = vadd.s32 %v352, %v342
        %v354 = vadd.s32 %v353, %v344
        %v355 = vmul.u32 %v310, %v301
        %v356 = vadd.s32 %v332, %v351
        %vm357 = vc.u32 %v332, %v351
        %v358 = vadd.s32 %v354, 1
        %v359 = vsel %vm357, %v358, %v354
        %v360 = vadd.s32 %v355, %v359
        %v361 = vadd.s32 %v360, 536870912
        %v362 = vshrl.u32 %v361, 30
        %v363 = vshll.u32 %v362, 30
        %v364 = vsub.s32 %v360, %v363
        %vm365 = vcmp.lt.s32.totalorder %v364, 0
        %v366 = vsub.s32 0, %v364
        %v367 = vsel %vm365, %v366, %v364
        %v368 = vclz %v367
        %v369 = vsub.s32 %v368, 2
        %vm370 = vcmp.gt.s32.totalorder 0, %v369
        %v371 = vsel %vm370, 0, %v369
        %v372 = vsub.s32 32, %v371
        %v373 = vshll.u32 %v364, %v371
        %v374 = vshrl.u32 %v356, %v372
        %v375 = vor.u32 %v373, %v374
        %v376 = vsub.s32 4294967266, %v371
        %v377 = vadd.s32 %v376, 127
        %v378 = vshll.u32 %v377, 23
        %v379 = vor.u32 4788187, %v378
        %v380 = vand.u32 2147483647, %v379
        %v382 = vcvt.s32.f32 %v375
        %v383 = vmul.f32 %v382, %v380
        %v384 = vxor.u32 %v383, 2147483648
        %v385 = vsel %vm264, %v384, %v383
        %v386 = vsub.s32 4, %v362
        %v387 = vsel %vm264, %v386, %v362
        %v388 = vsel %vm263, %v261, %v385
        %v389 = vsel %vm263, 0, %v387
        %v390 = vmul.f32 %v388, %v388
        %v391 = vmul.f32 %v390, -0.001358992
        %v392 = vadd.f32 %v391, 0.041655596
        %v393 = vmul.f32 %v390, %v392
        %v394 = vadd.f32 %v393, -0.4999988
        %v395 = vmul.f32 %v390, %v394
        %v396 = vadd.f32 1.0, %v395
        %v397 = vmul.f32 %v388, %v388
        %v398 = vmul.f32 %v397, -0.00019511016
        %v399 = vadd.f32 %v398, 0.008332121
        %v400 = vmul.f32 %v397, %v399
        %v401 = vadd.f32 %v400, -0.16666654
        %v402 = vmul.f32 %v397, %v401
        %v403 = vadd.f32 %v402, 1.0
        %v404 = vmul.f32 %v403, %v388
        %vm405 = vweird.f32 %v261
        %v406 = vand.u32 %v389, 3
        %vm407 = vcmp.lt.s32.totalorder %v406, 2
        %vm408 = vcmp.eq.s32.totalorder %v406, 0
        %v409 = vxor.u32 %v404, 2147483648
        %v410 = vsel %vm408, %v396, %v409
        %vm411 = vcmp.eq.s32.totalorder %v406, 2
        %v412 = vxor.u32 %v396, 2147483648
        %v413 = vsel %vm411, %v412, %v404
        %v414 = vsel %vm407, %v410, %v413
        %v415 = vsel %vm405, nan, %v414
        %v416 = vmul.f32 %v260, %v415
        %v417 = vand.u32 2147483647, %v261
        %vm418 = vcmp.le.f32.partialorder %v417, 0.7853982
        %vm419 = vcmp.lt.s32.totalorder %v261, 0
        %v420 = vand.u32 %v261, 2139095040
        %v421 = vshrl.u32 %v420, 23
        %v422 = vsub.s32 %v421, 127
        %v423 = vand.u32 2147483647, %v261
        %v424 = vand.u32 %v423, 8388607
        %v425 = vor.u32 %v424, 8388608
        %v426 = vsub.s32 0, %v425
        %v427 = vadd.s32 %v422, 1
        %vm428 = vcmp.gt.s32.totalorder %v427, 0
        %v429 = vsel %vm428, %v427, 0
        %v430 = vshrl.u32 %v429, 5
        %v431 = vand.u32 %v429, 31
        %v432 = vsub.s32 32, %v431
        %v433 = vshrl.u32 683565275, %v432
        %v434 = vshll.u32 683565275, %v431
        %v435 = vshrl.u32 2475754826, %v432
        %v436 = vor.u32 %v434, %v435
        %v437 = vshll.u32 2475754826, %v431
        %v438 = vshrl.u32 2131351028, %v432
        %v439 = vor.u32 %v437, %v438
        %v440 = vshll.u32 2131351028, %v431
        %v441 = vshrl.u32 2102212464, %v432
        %v442 = vor.u32 %v440, %v441
        %v443 = vshll.u32 2102212464, %v431
        %v444 = vshrl.u32 920167782, %v432
        %v445 = vor.u32 %v443, %v444
        %v446 = vshll.u32 920167782, %v431
        %v447 = vshrl.u32 1326507024, %v432
        %v448 = vor.u32 %v446, %v447
        %vm449 = vcmp.lt.s32.totalorder %v430, 1
        %vm450 = vcmp.lt.s32.totalorder %v430, 2
        %vm451 = vcmp.lt.s32.totalorder %v430, 3
        %vm452 = vcmp.lt.s32.totalorder %v430, 4
        %v453 = vsel %vm449, %v433, %v436
        %v454 = vsel %vm452, %v442, 2102212464
        %v455 = vsel %vm451, %v439, %v454
        %v456 = vsel %vm450, %v453, %v455
        %v457 = vsel %vm449, %v436, %v439
        %v458 = vsel %vm452, %v445, 920167782
        %v459 = vsel %vm451, %v442, %v458
        %v460 = vsel %vm450, %v457, %v459
        %v461 = vsel %vm449, %v439, %v442
        %v462 = vsel %vm452, %v448, 1326507024
        %v463 = vsel %vm451, %v445, %v462
        %v464 = vsel %vm450, %v461, %v463
        %v465 = vshll.u32 %v425, 8
        %v466 = vand.u32 %v465, 65535
        %v467 = vshrl.u32 %v465, 16
        %v468 = vand.u32 %v464, 65535
        %v469 = vshrl.u32 %v464, 16
        %v470 = vmul.u32 %v466, %v468
        %v471 = vmul.u32 %v466, %v469
        %v472 = vmul.u32 %v467, %v468
        %v473 = vmul.u32 %v467, %v469
        %v474 = vshll.u32 %v471, 16
        %v475 = vshrl.u32 %v471, 16
        %v476 = vshll.u32 %v472, 16
        %v477 = vshrl.u32 %v472, 16
        %vm478 = vc.u32 %v470, %v474
        %v479 = vsel %vm478, 1, 0
        %v480 = vadd.s32 %v470, %v474
        %v481 = vadd.s32 %v473, %v479
        %vm482 = vc.u32 %v480, %v476
        %v483 = vsel %vm482, 1, 0
        %v484 = vadd.s32 %v480, %v476
        %v485 = vadd.s32 %v481, %v483
        %v486 = vadd.s32 %v485, %v475
        %v487 = vadd.s32 %v486, %v477
        %v488 = vand.u32 %v465, 65535
        %v489 = vshrl.u32 %v465, 16
        %v490 = vand.u32 %v460, 65535
        %v491 = vshrl.u32 %v460, 16
        %v492 = vmul.u32 %v488, %v490
        %v493 = vmul.u32 %v488, %v491
        %v494 = vmul.u32 %v489, %v490
        %v495 = vmul.u32 %v489, %v491
        %v496 = vshll.u32 %v493, 16
        %v497 = vshrl.u32 %v493, 16
        %v498 = vshll.u32 %v494, 16
        %v499 = vshrl.u32 %v494, 16
        %vm500 = vc.u32 %v492, %v496
        %v501 = vsel %vm500, 1, 0
        %v502 = vadd.s32 %v492, %v496
        %v503 = vadd.s32 %v495, %v501
        %vm504 = vc.u32 %v502, %v498
        %v505 = vsel %vm504, 1, 0
        %v506 = vadd.s32 %v502, %v498
        %v507 = vadd.s32 %v503, %v505
        %v508 = vadd.s32 %v507, %v497
        %v509 = vadd.s32 %v508, %v499
        %v510 = vmul.u32 %v465, %v456
        %v511 = vadd.s32 %v487, %v506
        %vm512 = vc.u32 %v487, %v506
        %v513 = vadd.s32 %v509, 1
        %v514 = vsel %vm512, %v513, %v509
        %v515 = vadd.s32 %v510, %v514
        %v516 = vadd.s32 %v515, 536870912
        %v517 = vshrl.u32 %v516, 30
        %v518 = vshll.u32 %v517, 30
        %v519 = vsub.s32 %v515, %v518
        %vm520 = vcmp.lt.s32.totalorder %v519, 0
        %v521 = vsub.s32 0, %v519
        %v522 = vsel %vm520, %v521, %v519
        %v523 = vclz %v522
        %v524 = vsub.s32 %v523, 2
        %vm525 = vcmp.gt.s32.totalorder 0, %v524
        %v526 = vsel %vm525, 0, %v524
        %v527 = vsub.s32 32, %v526
        %v528 = vshll.u32 %v519, %v526
        %v529 = vshrl.u32 %v511, %v527
        %v530 = vor.u32 %v528, %v529
        %v531 = vsub.s32 4294967266, %v526
        %v532 = vadd.s32 %v531, 127
        %v533 = vshll.u32 %v532, 23
        %v534 = vor.u32 4788187, %v533
        %v535 = vand.u32 2147483647, %v534
        %v537 = vcvt.s32.f32 %v530
        %v538 = vmul.f32 %v537, %v535
        %v539 = vxor.u32 %v538, 2147483648
        %v540 = vsel %vm419, %v539, %v538
        %v541 = vsub.s32 4, %v517
        %v542 = vsel %vm419, %v541, %v517
        %v543 = vsel %vm418, %v261, %v540
        %v544 = vsel %vm418, 0, %v542
        %v545 = vmul.f32 %v543, %v543
        %v546 = vmul.f32 %v545, -0.001358992
        %v547 = vadd.f32 %v546, 0.041655596
        %v548 = vmul.f32 %v545, %v547
        %v549 = vadd.f32 %v548, -0.4999988
        %v550 = vmul.f32 %v545, %v549
        %v551 = vadd.f32 1.0, %v550
        %v552 = vmul.f32 %v543, %v543
        %v553 = vmul.f32 %v552, -0.00019511016
        %v554 = vadd.f32 %v553, 0.008332121
        %v555 = vmul.f32 %v552, %v554
        %v556 = vadd.f32 %v555, -0.16666654
        %v557 = vmul.f32 %v552, %v556
        %v558 = vadd.f32 %v557, 1.0
        %v559 = vmul.f32 %v558, %v543
        %vm560 = vweird.f32 %v261
        %v561 = vadd.s32 %v544, 3
        %v562 = vand.u32 %v561, 3
        %vm563 = vcmp.lt.s32.totalorder %v562, 2
        %vm564 = vcmp.eq.s32.totalorder %v562, 0
        %v565 = vxor.u32 %v559, 2147483648
        %v566 = vsel %vm564, %v551, %v565
        %vm567 = vcmp.eq.s32.totalorder %v562, 2
        %v568 = vxor.u32 %v551, 2147483648
        %v569 = vsel %vm567, %v568, %v559
        %v570 = vsel %vm563, %v566, %v569
        %v571 = vsel %vm560, nan, %v570
        %v572 = vmul.f32 %v260, %v571
        %v573 = vrot.slane %v416, 6
        %v574 = vadd.f32 %v416, %v573
        %v575 = vrot.slane %v572, 6
        %v576 = vadd.f32 %v572, %v575
        %v577 = vrot.slane %v574, 4
        %v578 = vadd.f32 %v574, %v577
        %v579 = vrot.slane %v576, 4
        %v580 = vadd.f32 %v576, %v579
        %v581 = vand.u32 2147483647, %v580
        %vm582 = vcmp.lt.f32.partialorder %v581, 4e-08
        %v583 = vsel %vm582, 4e-08, %v580
        %v584 = vmul.f32 %v578, %v578
        %v585 = vmul.f32 %v583, %v583
        %v586 = vadd.f32 %v584, %v585
        %v587 = vrsqrt.pop %v586
        %v588 = vmul.f32 %v587, %v586
        %v589 = vmul.f32 %v588, %v587
        %v590 = vmul.f32 0.5, %v589
        %v591 = vsub.f32 1.5, %v590
        %v592 = vmul.f32 %v587, %v591
        %vm593 = vweird.f32 %v586
        %vm594 = vweird.f32 %v587
        %vm595 = vmor %vm593, %vm594
        %v596 = vsel %vm595, %v587, %v592
        %v597 = vmul.f32 %v578, %v596
        %v598 = vmul.f32 %v583, %v596
        %v599 = vmul.f32 %v260, %v597
        %600 = vst [vmem:[%s252] sm:$0xff] %v599
        %v601 = vmul.f32 %v260, %v598
        %602 = vst [vmem:[%s259] sm:$0xff] %v601
        %s603 = sand.u32 %s105, 1
        %s604 = scalar_lea.sflag [#allocation4], %s603
        %s605 = sand.u32 %s105, 1
        %s606 = smul.addr %s605, 8
        %s607 = scalar_lea.vmem [#allocation7], %s606
        %s608 = sand.u32 %s133, 1
        %s609 = scalar_lea.sflag [#allocation9], %s608
        %s610 = sand.u32 %s133, 1
        %s611 = smul.addr %s610, 8
        %s612 = scalar_lea.vmem [#allocation8], %s611
        // Predicated region
        $region37: #{tpu_custom_call.1} parent=27 // pred_check
          %p613 = pneg %p115
        $region38: #{tpu_custom_call.1} parent=27 // pred_check_branch
          %615 = sbr.rel (%p613) target = $region40
        $region39: #{tpu_custom_call.1} parent=27 // pred_region
          %617 = vsyncadd %s604, 0
          %s618 = sadd.s32 %s32, %s31
          %s619 = smul.addr %s618, 8
          %s620 = scalar_lea.hbm %s2, %s619
          %s622 = sshll.u32 %s607, 4
          %s623 = int_to_ptr.vmem [resolvable:$true] %s622
          %s624 = sshll.u32 %s620, 4
          %s625 = int_to_ptr.hbm [resolvable:$true] %s624
          %627 = dma.vmem_to_hbm [thread:$0]  %s623, 128, %s625, %s604
        $region40: #{tpu_custom_call.1} parent=27 // pred_fallthru
          _
        // Predicated region
        $region41: #{tpu_custom_call.1} parent=27 // pred_check
          %p628 = pneg %p143
        $region42: #{tpu_custom_call.1} parent=27 // pred_check_branch
          %630 = sbr.rel (%p628) target = $region44
        $region43: #{tpu_custom_call.1} parent=27 // pred_region
          %632 = vsyncadd %s609, 0
          %s633 = sadd.s32 %s32, %s31
          %s634 = smul.addr %s633, 8
          %s635 = scalar_lea.hbm %s3, %s634
          %s637 = sshll.u32 %s612, 4
          %s638 = int_to_ptr.vmem [resolvable:$true] %s637
          %s639 = sshll.u32 %s635, 4
          %s640 = int_to_ptr.hbm [resolvable:$true] %s639
          %642 = dma.vmem_to_hbm [thread:$0]  %s638, 128, %s640, %s609
        $region44: #{tpu_custom_call.1} parent=27 // pred_fallthru
          _
      $region28: #{tpu_custom_call.1} parent=5 // pred_fallthru
        _
      %p643 = scmp.le.s32.totalorder 2, %s22
      // Predicated region
      $region45: #{tpu_custom_call.1} parent=5 // pred_check
        %p644 = pneg %p643
      $region46: #{tpu_custom_call.1} parent=5 // pred_check_branch
        %646 = sbr.rel (%p644) target = $region48
      $region47: #{tpu_custom_call.1} parent=5 // pred_region
        %s647 = ssub.s32 %s22, 2
        // Predicated region
        $region49: #{tpu_custom_call.1} parent=47 // pred_check
          %p648 = pneg %p121
        $region50: #{tpu_custom_call.1} parent=47 // pred_check_branch
          %650 = sbr.rel (%p648) target = $region52
        $region51: #{tpu_custom_call.1} parent=47 // pred_region
          %s651 = sand.u32 %s106, 1
          %s652 = scalar_lea.sflag [#allocation4], %s651
          %s653 = sand.u32 %s106, 1
          %s654 = smul.addr %s653, 8
          %s655 = scalar_lea.vmem [#allocation7], %s654
          %657 = dma.done %s652, 128
        $region52: #{tpu_custom_call.1} parent=47 // pred_fallthru
          _
        // Predicated region
        $region53: #{tpu_custom_call.1} parent=47 // pred_check
          %p658 = pneg %p149
        $region54: #{tpu_custom_call.1} parent=47 // pred_check_branch
          %660 = sbr.rel (%p658) target = $region56
        $region55: #{tpu_custom_call.1} parent=47 // pred_region
          %s661 = sand.u32 %s134, 1
          %s662 = scalar_lea.sflag [#allocation9], %s661
          %s663 = sand.u32 %s134, 1
          %s664 = smul.addr %s663, 8
          %s665 = scalar_lea.vmem [#allocation8], %s664
          %667 = dma.done %s662, 128
        $region56: #{tpu_custom_call.1} parent=47 // pred_fallthru
          _
      $region48: #{tpu_custom_call.1} parent=5 // pred_fallthru
        _
    $region6: #{tpu_custom_call.1} parent=1 // loop_footer
      %s26 = sadd.s32 1, %s22
    $region7: #{tpu_custom_call.1} parent=1 // loop_footer_branch
      %21 = sbr.rel target = $region3
    $region8: #{tpu_custom_call.1} parent=1 // loop_exit
      _
    %668 = vsyncpa [#allocation3], 1
    %s669 = scalar_lea.sflag [#allocation3], 1
    %670 = vsyncpa %s669, 1
    %671 = vsyncpa [#allocation6], 1
    %s672 = scalar_lea.sflag [#allocation6], 1
    %673 = vsyncpa %s672, 1
    %674 = vsyncpa [#allocation4], 1
    %s675 = scalar_lea.sflag [#allocation4], 1
    %676 = vsyncpa %s675, 1
    %677 = vsyncpa [#allocation9], 1
    %s678 = scalar_lea.sflag [#allocation9], 1
    %679 = vsyncpa %s678, 1

</llo_original>
